<compile_context>
chip_gen: v5e
topology: v5e:2x2
jax: 0.10.0
libtpu: 0.0.40
codegen_flags: <defaults>
</compile_context>

<pallas_src>
import jax
import jax.numpy as jnp
from jax.experimental import pallas as pl
from jax.experimental.pallas import tpu as pltpu


def layernorm_kernel(x_ref, gamma_ref, beta_ref, o_ref):
    # NOTE: eps is added to STD (sqrt(var) + eps), not to var, and variance is
    # UNBIASED (divide by D-1). This matches the custom PyTorch module exactly
    # and intentionally diverges from torch.nn.LayerNorm — do not "fix" it.
    # Precondition: D >= 2 (D == 1 gives NaN, same as torch.var unbiased).
    x_in = x_ref[...]                              # (TR, D), input dtype
    x = x_in.astype(jnp.float32)
    d = x.shape[-1]

    # Hoisted, single loads of the (1, D) parameters (constant index_map ->
    # Pallas DMAs them once and skips the copy on later grid steps).
    gamma = gamma_ref[...].astype(jnp.float32)     # (1, D)
    beta = beta_ref[...].astype(jnp.float32)       # (1, D)

    # Single-pass row statistics: one read of x feeds both XLU reductions, so
    # sum(x) and sum(x*x) overlap and no (TR, D) diff buffer stays live.
    s1 = jnp.sum(x, axis=-1, keepdims=True)        # (TR, 1)
    s2 = jnp.sum(x * x, axis=-1, keepdims=True)    # (TR, 1)
    mean = s1 * (1.0 / jnp.float32(d))
    # sum((x - mean)^2) == sum(x^2) - mean * sum(x); unbiased divide by D-1.
    var = (s2 - mean * s1) * (1.0 / jnp.float32(d - 1))
    var = jnp.maximum(var, 0.0)                    # guard f32 cancellation
    std = jnp.sqrt(var)

    # One reciprocal per row (EUP slot) instead of D VPU divides per row.
    inv = pl.reciprocal(std + jnp.float32(1e-5), approx=False)  # (TR, 1)

    if x_in.dtype == jnp.bfloat16:
        # bf16 VALU tail (v6e/v7x): halves per-element VPU work and the (TR, D)
        # f32 intermediate footprint. Harmless (just no gain) on v5e.
        yb = (gamma_ref[...].astype(jnp.bfloat16)
              * ((x_in - mean.astype(jnp.bfloat16)) * inv.astype(jnp.bfloat16))
              + beta_ref[...].astype(jnp.bfloat16))
        o_ref[...] = yb.astype(o_ref.dtype)
    else:
        y = gamma * ((x - mean) * inv) + beta
        o_ref[...] = y.astype(o_ref.dtype)


def _round_up(x, m):
    return (x + m - 1) // m * m


def _vmem_capacity_bytes():
    """Physical VMEM per TensorCore; conservative fallback if query fails."""
    try:
        info = pltpu.get_tpu_info()
        for attr in ("vmem_capacity_bytes", "vmem_bytes"):
            v = getattr(info, attr, None)
            if v:
                return int(v)
    except Exception:
        pass
    return 64 << 20  # v7x-sized fallback (smallest current generation)


def layer_norm(x, gamma, beta):
    """x: (..., D); gamma, beta: (D,). Returns same shape/dtype as x."""
    orig_shape = x.shape
    d = orig_shape[-1]
    x2 = x.reshape(-1, d)
    n_rows = x2.shape[0]

    in_bytes = jnp.dtype(x.dtype).itemsize
    out_bytes = in_bytes
    # Sublane multiple for this dtype: 8 (f32) / 16 (bf16) / 32 (int8).
    sub_mult = max(8, 32 // in_bytes)

    # --- VMEM-budgeted, generation-aware row tile ---------------------------
    vmem_cap = _vmem_capacity_bytes()                       # 128 MiB v5e/v6e, 64 MiB v7x
    vmem_limit = max(32 << 20, min(vmem_cap - (16 << 20), 96 << 20))
    # Single hedge: per_row already counts double-buffered in+out tiles plus
    # ~3 f32 working copies; params are only 2*D*4 bytes, so keep ~85%.
    budget = int(vmem_limit * 0.85)

    per_row = d * (2 * in_bytes + 2 * out_bytes + 3 * 4)
    tr = max(sub_mult, (budget // per_row) // sub_mult * sub_mult)
    tr = min(tr, 1024)                                      # diminishing returns past ~1024 rows
    tr = min(tr, _round_up(n_rows, sub_mult))               # don't over-allocate for tiny inputs
    tr = int(tr)

    gamma2 = gamma.reshape(1, d)
    beta2 = beta.reshape(1, d)

    # Ragged grid: no host-side pad or output slice. The last block may read
    # unspecified rows and its out-of-bounds output rows are discarded; this is
    # safe because rows are fully independent.
    grid = (pl.cdiv(n_rows, tr),)

    # TODO(synk): for D < 128 the lane axis is only partially used (masked
    # partial stores); a production path would fold several rows into the lane
    # axis with segmented reductions. Typical transformer hidden sizes
    # (multiples of 128) are already lane-dense.
    out = pl.pallas_call(
        layernorm_kernel,
        out_shape=jax.ShapeDtypeStruct((n_rows, d), x.dtype),
        grid_spec=pltpu.PrefetchScalarGridSpec(
            num_scalar_prefetch=0,
            grid=grid,
            in_specs=[
                pl.BlockSpec((tr, d), lambda i: (i, 0)),
                pl.BlockSpec((1, d), lambda i: (0, 0)),   # constant index: DMA'd once
                pl.BlockSpec((1, d), lambda i: (0, 0)),
            ],
            out_specs=pl.BlockSpec((tr, d), lambda i: (i, 0)),
        ),
        compiler_params=pltpu.CompilerParams(
            dimension_semantics=("parallel",),            # row tiles are independent
            vmem_limit_bytes=int(vmem_limit),
        ),
    )(x2, gamma2, beta2)

    return out.reshape(orig_shape)


if __name__ == "__main__":
    key = jax.random.PRNGKey(0)
    batch, seq, hidden = 2, 8, 32

    x = jax.random.normal(key, (batch, seq, hidden), dtype=jnp.float32)

    # Parameters initialized exactly as the module's __init__: ones / zeros.
    gamma = jnp.ones((hidden,), dtype=jnp.float32)
    beta = jnp.zeros((hidden,), dtype=jnp.float32)

    y = layer_norm(x, gamma, beta)
    jax.block_until_ready(y)

    # Reference check (pure JAX, same math as the PyTorch forward).
    mean = jnp.mean(x, axis=-1, keepdims=True)
    var = jnp.sum((x - mean) ** 2, axis=-1, keepdims=True) / (hidden - 1)
    y_ref = gamma * ((x - mean) / (jnp.sqrt(var) + 1e-5)) + beta
    assert jnp.allclose(y, y_ref, atol=1e-4, rtol=1e-4), "mismatch vs reference"

    print("KERNEL_OK")
</pallas_src>

<mosaic_0001>
module attributes {stable_mosaic.version = 11 : i64} {
  func.func @layernorm_kernel(%arg0: i32, %arg1: memref<16x32xf32, #tpu.memory_space<vmem>>, %arg2: memref<1x32xf32, #tpu.memory_space<vmem>>, %arg3: memref<1x32xf32, #tpu.memory_space<vmem>>, %arg4: memref<16x32xf32, #tpu.memory_space<vmem>>) attributes {dimension_semantics = [#tpu.dimension_semantics<parallel>], iteration_bounds = array<i64: 1>, scalar_prefetch = 0 : i64, scratch_operands = 0 : i64, tpu.core_type = #tpu.core_type<tc>, window_params = [{transform_indices = @transform_0, window_bounds = array<i64: 16, 32>}, {pipeline_mode = #tpu.pipeline_mode<synchronous>, transform_indices = @transform_1, window_bounds = array<i64: 1, 32>}, {pipeline_mode = #tpu.pipeline_mode<synchronous>, transform_indices = @transform_2, window_bounds = array<i64: 1, 32>}, {transform_indices = @transform_3, window_bounds = array<i64: 16, 32>}]} {
    %c0 = arith.constant 0 : index
    %c0_0 = arith.constant 0 : index
    %0 = vector.load %arg1[%c0, %c0_0] : memref<16x32xf32, #tpu.memory_space<vmem>>, vector<16x32xf32>
    %c0_1 = arith.constant 0 : index
    %c0_2 = arith.constant 0 : index
    %1 = vector.load %arg2[%c0_1, %c0_2] : memref<1x32xf32, #tpu.memory_space<vmem>>, vector<1x32xf32>
    %c0_3 = arith.constant 0 : index
    %c0_4 = arith.constant 0 : index
    %2 = vector.load %arg3[%c0_3, %c0_4] : memref<1x32xf32, #tpu.memory_space<vmem>>, vector<1x32xf32>
    %cst = arith.constant dense<0.000000e+00> : vector<16xf32>
    %3 = vector.multi_reduction <add>, %0, %cst [1] : vector<16x32xf32> to vector<16xf32>
    %4 = vector.shape_cast %3 : vector<16xf32> to vector<16x1xf32>
    %5 = arith.mulf %0, %0 : vector<16x32xf32>
    %cst_5 = arith.constant dense<0.000000e+00> : vector<16xf32>
    %6 = vector.multi_reduction <add>, %5, %cst_5 [1] : vector<16x32xf32> to vector<16xf32>
    %7 = vector.shape_cast %6 : vector<16xf32> to vector<16x1xf32>
    %cst_6 = arith.constant 1.000000e+00 : f32
    %cst_7 = arith.constant 3.200000e+01 : f32
    %8 = arith.divf %cst_6, %cst_7 : f32
    %9 = vector.broadcast %8 : f32 to vector<16x1xf32>
    %10 = arith.mulf %4, %9 : vector<16x1xf32>
    %11 = arith.mulf %10, %4 : vector<16x1xf32>
    %12 = arith.subf %7, %11 : vector<16x1xf32>
    %cst_8 = arith.constant 1.000000e+00 : f32
    %cst_9 = arith.constant 3.100000e+01 : f32
    %13 = arith.divf %cst_8, %cst_9 : f32
    %14 = vector.broadcast %13 : f32 to vector<16x1xf32>
    %15 = arith.mulf %12, %14 : vector<16x1xf32>
    %cst_10 = arith.constant 0.000000e+00 : f32
    %16 = vector.broadcast %cst_10 : f32 to vector<16x1xf32>
    %17 = arith.maximumf %15, %16 : vector<16x1xf32>
    %18 = math.sqrt %17 : vector<16x1xf32>
    %cst_11 = arith.constant 9.99999974E-6 : f32
    %19 = vector.broadcast %cst_11 : f32 to vector<16x1xf32>
    %20 = arith.addf %18, %19 : vector<16x1xf32>
    %21 = tpu.reciprocal %20 : vector<16x1xf32> -> vector<16x1xf32>
    %22 = vector.broadcast %10 : vector<16x1xf32> to vector<16x32xf32>
    %23 = arith.subf %0, %22 : vector<16x32xf32>
    %24 = vector.broadcast %21 : vector<16x1xf32> to vector<16x32xf32>
    %25 = arith.mulf %23, %24 : vector<16x32xf32>
    %26 = vector.broadcast %1 : vector<1x32xf32> to vector<16x32xf32>
    %27 = arith.mulf %26, %25 : vector<16x32xf32>
    %28 = vector.broadcast %2 : vector<1x32xf32> to vector<16x32xf32>
    %29 = arith.addf %27, %28 : vector<16x32xf32>
    %c0_12 = arith.constant 0 : index
    %c0_13 = arith.constant 0 : index
    %30 = vector.load %arg4[%c0_12, %c0_13] : memref<16x32xf32, #tpu.memory_space<vmem>>, vector<16x32xf32>
    tpu.vector_store %arg4[%c0_12, %c0_13], %29 {strides = array<i32>} : memref<16x32xf32, #tpu.memory_space<vmem>>, vector<16x32xf32>,
    return
  }
  func.func @transform_0(%arg0: i32) -> (i32, i32) {
    %c0_i32 = arith.constant 0 : i32
    %c0_i32_0 = arith.constant 0 : i32
    return %arg0, %c0_i32 : i32, i32
  }
  func.func @transform_1(%arg0: i32) -> (i32, i32) {
    %c0_i32 = arith.constant 0 : i32
    %c0_i32_0 = arith.constant 0 : i32
    %c0_i32_1 = arith.constant 0 : i32
    return %c0_i32, %c0_i32_0 : i32, i32
  }
  func.func @transform_2(%arg0: i32) -> (i32, i32) {
    %c0_i32 = arith.constant 0 : i32
    %c0_i32_0 = arith.constant 0 : i32
    %c0_i32_1 = arith.constant 0 : i32
    return %c0_i32, %c0_i32_0 : i32, i32
  }
  func.func @transform_3(%arg0: i32) -> (i32, i32) {
    %c0_i32 = arith.constant 0 : i32
    %c0_i32_0 = arith.constant 0 : i32
    return %arg0, %c0_i32 : i32, i32
  }
}

</mosaic_0001>

<llo_original>
// kernel: tpu_custom_call.1
$region0: #{tpu_custom_call.1}
  #allocation0 [shape = 'u32[]', space=smem, size = 0x4, offset = 0x4, fixed_abs, tag = 'smem constant byte address 0x4 - core index']
  #allocation1 [shape = 'u32[72,128]{1,0:T(1,128)}', space=vmem, size = 0x9000, scoped, tag = 'internal scratch']
  %s0 = inlined_call_operand.hbm [shape: f32[16,32], index: 0, kind: input, shape index: {}]
  %s1 = inlined_call_operand.hbm [shape: f32[1,32], index: 1, kind: input, shape index: {}]
  %s2 = inlined_call_operand.vmem [shape: f32[1,32], index: 2, kind: input, shape index: {}]
  %s3 = inlined_call_operand.hbm [shape: f32[16,32], index: 3, kind: output, shape index: {}]
  %s4 = sld [smem:[#allocation0]]
  $region30: #{tpu_custom_call.1} parent=0
    _
  %s6 = ssub.s32 1, %s4
  %s7 = scalar_select 0, %s6, %s4
  $region1: #{tpu_custom_call.1} parent=0
    #allocation2 [shape = 'u8[8192]{0}', space=vmem, size = 0x2000, scoped, tag = 'input window, operand 0, single buffered']
    #allocation3 [shape = 's32[1]{0}', space=sflag, size = 0x4, scoped, tag = 'scoped memory for tpu_custom_call.1']
    #allocation4 [shape = 's32[1]{0}', space=sflag, size = 0x4, scoped, tag = 'scoped memory for tpu_custom_call.1']
    #allocation5 [shape = 'u8[512]{0}', space=vmem, size = 0x400, scoped, tag = 'input window, operand 1, single buffered']
    #allocation6 [shape = 's32[1]{0}', space=sflag, size = 0x4, scoped, tag = 'scoped memory for tpu_custom_call.1']
    #allocation7 [shape = 'u8[8192]{0}', space=vmem, size = 0x2000, scoped, tag = 'output window, operand 0, single buffered']
    %8 = vsyncpa [#allocation3], 0
    %9 = vsyncpa [#allocation6], 0
    %10 = vsyncpa [#allocation4], 0
    // Predicated region
    $region2: #{tpu_custom_call.1} parent=1 // pred_check
      _
    $region3: #{tpu_custom_call.1} parent=1 // pred_check_branch
      %12 = sbr.rel (0) target = $region5
    $region4: #{tpu_custom_call.1} parent=1 // pred_region
      %14 = vsyncadd [#allocation3], 0
      %s15 = sshll.u32 %s0, 4
      %s16 = int_to_ptr.hbm [resolvable:$true] %s15
      %s17 = sshll.u32 [#allocation2], 4
      %s18 = int_to_ptr.vmem [resolvable:$true] %s17
      %23 = dma.hbm_to_vmem [thread:$0]  %s16, 256, %s18, [#allocation3], 128, 128, 8
    $region5: #{tpu_custom_call.1} parent=1 // pred_fallthru
      _
    // Predicated region
    $region6: #{tpu_custom_call.1} parent=1 // pred_check
      _
    $region7: #{tpu_custom_call.1} parent=1 // pred_check_branch
      %25 = sbr.rel (0) target = $region9
    $region8: #{tpu_custom_call.1} parent=1 // pred_region
      %27 = vsyncadd [#allocation6], 0
      %s29 = sshll.u32 %s1, 4
      %s30 = int_to_ptr.hbm [resolvable:$true] %s29
      %s31 = sshll.u32 [#allocation5], 4
      %s32 = int_to_ptr.vmem [resolvable:$true] %s31
      %34 = dma.hbm_to_vmem [thread:$0]  %s30, 16, %s32, [#allocation6]
    $region9: #{tpu_custom_call.1} parent=1 // pred_fallthru
      _
    // Predicated region
    $region10: #{tpu_custom_call.1} parent=1 // pred_check
      _
    $region11: #{tpu_custom_call.1} parent=1 // pred_check_branch
      %36 = sbr.rel (0) target = $region13
    $region12: #{tpu_custom_call.1} parent=1 // pred_region
      _
    $region13: #{tpu_custom_call.1} parent=1 // pred_fallthru
      _
    // Predicated region
    $region14: #{tpu_custom_call.1} parent=1 // pred_check
      _
    $region15: #{tpu_custom_call.1} parent=1 // pred_check_branch
      %38 = sbr.rel (0) target = $region17
    $region16: #{tpu_custom_call.1} parent=1 // pred_region
      %40 = dma.done [#allocation3], 256
    $region17: #{tpu_custom_call.1} parent=1 // pred_fallthru
      _
    // Predicated region
    $region18: #{tpu_custom_call.1} parent=1 // pred_check
      _
    $region19: #{tpu_custom_call.1} parent=1 // pred_check_branch
      %42 = sbr.rel (0) target = $region21
    $region20: #{tpu_custom_call.1} parent=1 // pred_region
      %44 = dma.done [#allocation6], 16
    $region21: #{tpu_custom_call.1} parent=1 // pred_fallthru
      _
    %v45 = vld [vmem:[#allocation2] sm:$0xff]
    %v46 = vld [vmem:[#allocation2 + $0x8] sm:$0xff]
    %v47 = vld [vmem:[#allocation5] sm:$0x1]
    %v48 = vld [vmem:[%s2] sm:$0x1]
    %vm49 = vcmask 261120
    %v50 = vsel %vm49, %v45, 0.0
    %51 = vadd.xlane.f32.xlu0 %v50
    %v52 = vpop.xlane.xlu0 %51
    %v53 = vsel %vm49, %v46, 0.0
    %54 = vadd.xlane.f32.xlu0 %v53
    %v55 = vpop.xlane.xlu0 %54
    %v56 = vmul.f32 %v45, %v45
    %v57 = vmul.f32 %v46, %v46
    %v58 = vsel %vm49, %v56, 0.0
    %59 = vadd.xlane.f32.xlu0 %v58
    %v60 = vpop.xlane.xlu0 %59
    %v61 = vsel %vm49, %v57, 0.0
    %62 = vadd.xlane.f32.xlu0 %v61
    %v63 = vpop.xlane.xlu0 %62
    %v64 = vmul.f32 %v52, 0.03125
    %v65 = vmul.f32 %v55, 0.03125
    %v66 = vmul.f32 %v64, %v52
    %v67 = vmul.f32 %v65, %v55
    %v68 = vsub.f32 %v60, %v66
    %v69 = vsub.f32 %v63, %v67
    %v70 = vmul.f32 %v68, 0.032258064
    %v71 = vmul.f32 %v69, 0.032258064
    %v72 = vmax.f32 %v70, 0.0
    %v73 = vmax.f32 %v71, 0.0
    %v74 = vrsqrt.pop %v72
    %v75 = vmul.f32 %v74, %v72
    %v76 = vmul.f32 %v75, %v74
    %v77 = vmul.f32 0.5, %v76
    %v78 = vsub.f32 1.5, %v77
    %v79 = vmul.f32 %v74, %v78
    %v80 = vmul.f32 %v72, %v79
    %vm81 = vcmp.eq.f32.partialorder %v72, inf
    %v82 = vsel %vm81, %v72, %v80
    %vm83 = vcmp.eq.f32.partialorder %v72, 0.0
    %v84 = vand.u32 %v72, 2147483648
    %v85 = vsel %vm83, %v84, %v82
    %v86 = vrsqrt.pop %v73
    %v87 = vmul.f32 %v86, %v73
    %v88 = vmul.f32 %v87, %v86
    %v89 = vmul.f32 0.5, %v88
    %v90 = vsub.f32 1.5, %v89
    %v91 = vmul.f32 %v86, %v90
    %v92 = vmul.f32 %v73, %v91
    %vm93 = vcmp.eq.f32.partialorder %v73, inf
    %v94 = vsel %vm93, %v73, %v92
    %vm95 = vcmp.eq.f32.partialorder %v73, 0.0
    %v96 = vand.u32 %v73, 2147483648
    %v97 = vsel %vm95, %v96, %v94
    %v98 = vadd.f32 %v85, 1e-05
    %v99 = vadd.f32 %v97, 1e-05
    %v100 = vrcp.pop %v98
    %v101 = vmul.f32 %v98, %v100
    %v102 = vsub.f32 1.0, %v101
    %v103 = vmul.f32 %v100, %v102
    %v104 = vadd.f32 %v100, %v103
    %vm105 = vweird.f32 %v98
    %vm106 = vweird.f32 %v100
    %vm107 = vmor %vm105, %vm106
    %v108 = vsel %vm107, %v100, %v104
    %v109 = vand.u32 2147483647, %v98
    %vm110 = vcmp.eq.f32.partialorder %v109, 8.507059e+37
    %v111 = vand.u32 %v98, 2147483648
    %v112 = vor.u32 1.1754944e-38, %v111
    %v113 = vsel %vm110, %v112, %v108
    %v114 = vrcp.pop %v99
    %v115 = vmul.f32 %v99, %v114
    %v116 = vsub.f32 1.0, %v115
    %v117 = vmul.f32 %v114, %v116
    %v118 = vadd.f32 %v114, %v117
    %vm119 = vweird.f32 %v99
    %vm120 = vweird.f32 %v114
    %vm121 = vmor %vm119, %vm120
    %v122 = vsel %vm121, %v114, %v118
    %v123 = vand.u32 2147483647, %v99
    %vm124 = vcmp.eq.f32.partialorder %v123, 8.507059e+37
    %v125 = vand.u32 %v99, 2147483648
    %v126 = vor.u32 1.1754944e-38, %v125
    %v127 = vsel %vm124, %v126, %v122
    %v128 = vsub.f32 %v45, %v64
    %v129 = vsub.f32 %v46, %v65
    %v130 = vmul.f32 %v128, %v113
    %v131 = vmul.f32 %v129, %v127
    %v133 = vperm.slane %v47, 0
    %v135 = vmul.f32 %v133, %v130
    %v136 = vmul.f32 %v133, %v131
    %v138 = vperm.slane %v48, 0
    %v140 = vadd.f32 %v135, %v138
    %v141 = vadd.f32 %v136, %v138
    %142 = vst.msk [vmem:[#allocation7] sm:$0xff] %vm49, %v140
    %143 = vst.msk [vmem:[#allocation7 + $0x8] sm:$0xff] %vm49, %v141
    // Predicated region
    $region22: #{tpu_custom_call.1} parent=1 // pred_check
      _
    $region23: #{tpu_custom_call.1} parent=1 // pred_check_branch
      %145 = sbr.rel (0) target = $region25
    $region24: #{tpu_custom_call.1} parent=1 // pred_region
      %147 = vsyncadd [#allocation4], 0
      %s148 = sshll.u32 [#allocation7], 4
      %s149 = int_to_ptr.vmem [resolvable:$true] %s148
      %s150 = sshll.u32 %s3, 4
      %s151 = int_to_ptr.hbm [resolvable:$true] %s150
      %156 = dma.vmem_to_hbm [thread:$0]  %s149, 256, %s151, [#allocation4], 128, 128, 8
    $region25: #{tpu_custom_call.1} parent=1 // pred_fallthru
      _
    // Predicated region
    $region26: #{tpu_custom_call.1} parent=1 // pred_check
      _
    $region27: #{tpu_custom_call.1} parent=1 // pred_check_branch
      %158 = sbr.rel (0) target = $region29
    $region28: #{tpu_custom_call.1} parent=1 // pred_region
      %160 = dma.done [#allocation4], 256
    $region29: #{tpu_custom_call.1} parent=1 // pred_fallthru
      _
    %161 = vsyncpa [#allocation3], 1
    %162 = vsyncpa [#allocation6], 1
    %163 = vsyncpa [#allocation4], 1

</llo_original>
